<compile_context>
chip_gen: v7x
topology: tpu7x:2x2x1
jax: 0.10.0
libtpu: 0.0.40
codegen_flags: <defaults>
</compile_context>

<pallas_src>
import math

import jax
import jax.numpy as jnp
from jax.experimental import pallas as pl
from jax.experimental.pallas import tpu as pltpu

_SQRT_2_OVER_PI = math.sqrt(2.0 / math.pi)


# ----------------------------------------------------------------------------
# Kernel body: pure streaming elementwise math, f32 internally.
# ----------------------------------------------------------------------------
def _new_gelu_kernel(x_ref, o_ref):
    x = x_ref[...]
    xf = x.astype(jnp.float32)                    # no-op for f32; upcast bf16/f16
    inner = _SQRT_2_OVER_PI * (xf + 0.044715 * (xf * xf * xf))
    y = 0.5 * xf * (1.0 + jnp.tanh(inner))        # tanh goes to the EUP slot
    o_ref[...] = y.astype(o_ref.dtype)            # store back in the input dtype


# ----------------------------------------------------------------------------
# Generation-aware budgets.
# ----------------------------------------------------------------------------
def _generation_budget():
    """Return (target_tile_bytes, vmem_limit_cap_bytes) from physical VMEM."""
    vmem_phys = None
    try:
        info = pltpu.get_tpu_info()
        vmem_phys = int(getattr(info, "vmem_capacity_bytes", 0)) or None
    except Exception:  # query unavailable in this context — stay conservative
        vmem_phys = None
    if vmem_phys is None or vmem_phys <= (80 << 20):
        # v7x-class (64 MiB physical VMEM, 2 TCs, ~3.2 TB/s HBM) or unknown:
        # big tiles + 2-deep buffering, total buffering well under physical.
        return 8 << 20, 40 << 20
    # v5e / v6e: 128 MiB physical VMEM, single TC → allow even larger tiles.
    return 12 << 20, 64 << 20


# ----------------------------------------------------------------------------
# Tiling.
# ----------------------------------------------------------------------------
def _choose_row_tile(R, C, itemsize, target_bytes):
    """Rows per full-width block, or None if rows are too wide to fit."""
    row_mult = max(8, 32 // itemsize)     # sublane packing: 8 f32, 16 bf16/f16
    row_bytes = C * itemsize
    total_bytes = R * row_bytes

    if row_mult * row_bytes > target_bytes:
        return None                        # fall back to column tiling

    # Largest sublane-aligned row tile under the byte target (no 1024-row cap).
    max_rows = max(row_mult, (target_bytes // row_bytes) // row_mult * row_mult)

    # Prefer >= 4 grid steps (pipeline steady state + dual-TC sharding on v7x)
    # as long as each step still moves >= ~512 KiB.
    min_step_bytes = 512 << 10
    max_useful_steps = max(1, total_bytes // min_step_bytes)
    want_steps = min(4, max_useful_steps)

    steps = max(want_steps, pl.cdiv(R, max_rows))
    steps = min(steps, max(1, R // row_mult))   # keep tiles >= one sublane pack
    if steps > 1 and steps % 2:
        steps += 1                              # even step count balances 2 TCs

    tr = pl.cdiv(R, steps)
    tr = ((tr + row_mult - 1) // row_mult) * row_mult
    return min(tr, R)


def _choose_col_tiles(R, C, itemsize, target_bytes):
    """Fallback for extremely wide rows: tile the lane dim too."""
    tr = R if R <= 256 else 256
    tc = max(128, (target_bytes // (max(tr, 1) * itemsize)) // 128 * 128)
    tc = min(tc, C)
    return tr, tc


def _make_in_spec(block_shape, index_map, depth):
    """Input BlockSpec; depth 2 is the Pallas default (no pipeline_mode)."""
    if depth is None or depth == 2:
        return pl.BlockSpec(block_shape, index_map)
    buffered = getattr(pl, "Buffered", None)
    if buffered is None:
        return pl.BlockSpec(block_shape, index_map)
    try:
        return pl.BlockSpec(block_shape, index_map, pipeline_mode=buffered(depth))
    except TypeError:
        # This jax version's BlockSpec has no pipeline_mode kwarg.
        return pl.BlockSpec(block_shape, index_map)


# ----------------------------------------------------------------------------
# 2-D entry point.
# ----------------------------------------------------------------------------
def new_gelu_2d(x, *, target_tile_bytes=None, vmem_limit_bytes=None,
                input_buffer_depth=2, donate=False):
    """Elementwise tanh-GELU on a 2-D array via a tiled Pallas kernel."""
    R, C = x.shape
    itemsize = jnp.dtype(x.dtype).itemsize
    gen_tile_bytes, gen_vmem_cap = _generation_budget()
    if target_tile_bytes is None:
        target_tile_bytes = gen_tile_bytes

    tr = _choose_row_tile(R, C, itemsize, target_tile_bytes)
    if tr is not None:
        # Full-width row tiles: contiguous DMA, lane-dense unmasked stores.
        block = (tr, C)
        grid = (pl.cdiv(R, tr),)
        index_map = lambda i: (i, 0)
        dims = ("parallel",)
    else:
        # Extremely wide rows: tile the lane dim too (multiple of 128).
        tr, tc = _choose_col_tiles(R, C, itemsize, target_tile_bytes)
        block = (tr, tc)
        grid = (pl.cdiv(R, tr), pl.cdiv(C, tc))
        index_map = lambda i, j: (i, j)
        dims = ("parallel", "parallel")

    tile_bytes = block[0] * block[1] * itemsize
    if vmem_limit_bytes is None:
        # input_buffer_depth input buffers + 2 output buffers + headroom,
        # capped per generation (40 MiB on 64 MiB-VMEM chips, 64 MiB otherwise).
        needed = (max(input_buffer_depth, 2) + 2) * tile_bytes + (2 << 20)
        vmem_limit_bytes = int(min(gen_vmem_cap, max(32 << 20, needed)))

    extra = {}
    if donate:
        # No bandwidth win, but halves HBM footprint when callers donate x.
        extra["input_output_aliases"] = {0: 0}

    return pl.pallas_call(
        _new_gelu_kernel,
        out_shape=jax.ShapeDtypeStruct((R, C), x.dtype),
        grid_spec=pl.GridSpec(
            grid=grid,
            in_specs=[_make_in_spec(block, index_map, input_buffer_depth)],
            out_specs=pl.BlockSpec(block, index_map),
        ),
        compiler_params=pltpu.CompilerParams(
            dimension_semantics=dims,
            vmem_limit_bytes=vmem_limit_bytes,
        ),
        **extra,
    )(x)


# ----------------------------------------------------------------------------
# Rank-agnostic wrapper: lane-dense 2-D view (elementwise ⇒ any reshape is free).
# ----------------------------------------------------------------------------
def _lane_dense_2d_shape(shape, n):
    last = shape[-1] if len(shape) >= 1 else 1
    # Natural flatten already lane-dense (last dim a multiple of 128): keep it.
    if len(shape) >= 2 and last % 128 == 0:
        return (n // last, last)
    # Otherwise pick the widest 128-multiple column count that divides N.
    for c in (4096, 2048, 1024, 512, 384, 256, 128):
        if n % c == 0:
            return (n // c, c)
    # No 128-multiple factor: fall back to the natural layout (correct; the
    # ragged lane edge just uses masked stores).
    if len(shape) >= 2:
        return (n // last, last)
    return (1, n)


def new_gelu(x, **kwargs):
    """Tanh-GELU for arbitrary-rank inputs (matches the PyTorch module)."""
    orig_shape = x.shape
    if x.size == 0:
        return x
    shape2d = _lane_dense_2d_shape(orig_shape, x.size)
    out = new_gelu_2d(x.reshape(shape2d), **kwargs)
    return out.reshape(orig_shape)


# ----------------------------------------------------------------------------
# Reference + self-test.
# ----------------------------------------------------------------------------
def _reference(x):
    xf = x.astype(jnp.float32)
    return 0.5 * xf * (1.0 + jnp.tanh(
        _SQRT_2_OVER_PI * (xf + 0.044715 * jnp.power(xf, 3.0))))


if __name__ == "__main__":
    key = jax.random.PRNGKey(0)
    k1, k2, k3 = jax.random.split(key, 3)

    # Small (batch, seq, hidden) shape consistent with the elementwise forward.
    # NOTE: tuning/benchmarking should use >=64 MiB arrays via an xprof trace;
    # this harness only checks correctness.
    x = jax.random.normal(k1, (2, 64, 256), dtype=jnp.float32)
    y = new_gelu(x)
    jax.block_until_ready(y)
    y_ref = _reference(x)
    assert y.shape == x.shape and y.dtype == x.dtype
    assert jnp.allclose(y, y_ref, atol=1e-6, rtol=1e-6), "f32 mismatch vs reference"

    # bf16 path: HBM traffic stays bf16, math is f32 inside the kernel.
    xb = x.astype(jnp.bfloat16)
    yb = new_gelu(xb)
    jax.block_until_ready(yb)
    yb_ref = _reference(xb).astype(jnp.bfloat16)
    assert yb.shape == xb.shape and yb.dtype == jnp.bfloat16
    assert jnp.allclose(yb.astype(jnp.float32), yb_ref.astype(jnp.float32),
                        atol=2e-2, rtol=2e-2), "bf16 mismatch vs reference"

    # Last dim not a multiple of 128 → exercises the lane-dense reshape path
    # (N = 4*8*100 = 3200 → viewed as (25, 128)).
    x_odd = jax.random.normal(k2, (4, 8, 100), dtype=jnp.float32)
    y_odd = new_gelu(x_odd)
    jax.block_until_ready(y_odd)
    assert y_odd.shape == x_odd.shape
    assert jnp.allclose(y_odd, _reference(x_odd), atol=1e-6, rtol=1e-6), "odd-dim mismatch"

    # 1-D input whose size has no 128 factor → masked-store fallback, still correct.
    x_1d = jax.random.normal(k3, (1000,), dtype=jnp.float32)
    y_1d = new_gelu(x_1d)
    jax.block_until_ready(y_1d)
    assert y_1d.shape == x_1d.shape
    assert jnp.allclose(y_1d, _reference(x_1d), atol=1e-6, rtol=1e-6), "1-D mismatch"

    print("KERNEL_OK")
</pallas_src>

<mosaic_0001>
module attributes {stable_mosaic.version = 11 : i64} {
  func.func @_new_gelu_kernel(%arg0: i32, %arg1: memref<128x256xf32, #tpu.memory_space<vmem>>, %arg2: memref<128x256xf32, #tpu.memory_space<vmem>>) attributes {dimension_semantics = [#tpu.dimension_semantics<parallel>], iteration_bounds = array<i64: 1>, scalar_prefetch = 0 : i64, scratch_operands = 0 : i64, tpu.core_type = #tpu.core_type<tc>, window_params = [{transform_indices = @transform_0, window_bounds = array<i64: 128, 256>}, {transform_indices = @transform_1, window_bounds = array<i64: 128, 256>}]} {
    %c0 = arith.constant 0 : index
    %c0_0 = arith.constant 0 : index
    %0 = vector.load %arg1[%c0, %c0_0] : memref<128x256xf32, #tpu.memory_space<vmem>>, vector<128x256xf32>
    %1 = arith.mulf %0, %0 : vector<128x256xf32>
    %2 = arith.mulf %1, %0 : vector<128x256xf32>
    %cst = arith.constant 4.471500e-02 : f32
    %3 = vector.broadcast %cst : f32 to vector<128x256xf32>
    %4 = arith.mulf %3, %2 : vector<128x256xf32>
    %5 = arith.addf %0, %4 : vector<128x256xf32>
    %cst_1 = arith.constant 0.797884583 : f32
    %6 = vector.broadcast %cst_1 : f32 to vector<128x256xf32>
    %7 = arith.mulf %6, %5 : vector<128x256xf32>
    %cst_2 = arith.constant 5.000000e-01 : f32
    %8 = vector.broadcast %cst_2 : f32 to vector<128x256xf32>
    %9 = arith.mulf %8, %0 : vector<128x256xf32>
    %10 = math.tanh %7 : vector<128x256xf32>
    %cst_3 = arith.constant 1.000000e+00 : f32
    %11 = vector.broadcast %cst_3 : f32 to vector<128x256xf32>
    %12 = arith.addf %11, %10 : vector<128x256xf32>
    %13 = arith.mulf %9, %12 : vector<128x256xf32>
    %c0_4 = arith.constant 0 : index
    %c0_5 = arith.constant 0 : index
    %14 = vector.load %arg2[%c0_4, %c0_5] : memref<128x256xf32, #tpu.memory_space<vmem>>, vector<128x256xf32>
    tpu.vector_store %arg2[%c0_4, %c0_5], %13 {strides = array<i32>} : memref<128x256xf32, #tpu.memory_space<vmem>>, vector<128x256xf32>,
    return
  }
  func.func @transform_0(%arg0: i32) -> (i32, i32) {
    %c0_i32 = arith.constant 0 : i32
    %c0_i32_0 = arith.constant 0 : i32
    return %arg0, %c0_i32 : i32, i32
  }
  func.func @transform_1(%arg0: i32) -> (i32, i32) {
    %c0_i32 = arith.constant 0 : i32
    %c0_i32_0 = arith.constant 0 : i32
    return %arg0, %c0_i32 : i32, i32
  }
}

</mosaic_0001>

<llo_original>
// kernel: tpu_custom_call.1
$region0: #{tpu_custom_call.1}
  #allocation0 [shape = 'u32[]', space=smem, size = 0x4, offset = 0x4, fixed_abs, tag = 'smem constant byte address 0x4 - core index']
  #allocation1 [shape = 'u32[144,128]{1,0:T(1,128)}', space=vmem, size = 0x12000, scoped, tag = 'internal scratch']
  %s0 = inlined_call_operand.hbm [shape: f32[128,256], index: 0, kind: input, shape index: {}]
  %s1 = inlined_call_operand.hbm [shape: f32[128,256], index: 1, kind: output, shape index: {}]
  %s2 = sld [smem:[#allocation0]]
  $region18: #{tpu_custom_call.1} parent=0
    _
  %s4 = ssub.s32 1, %s2
  %s5 = scalar_select 0, %s4, %s2
  $region1: #{tpu_custom_call.1} parent=0
    #allocation2 [shape = 'u8[131072]{0}', space=vmem, size = 0x20000, scoped, tag = 'input window, operand 0, single buffered']
    #allocation3 [shape = 's32[1]{0}', space=sflag, size = 0x4, scoped, tag = 'scoped memory for tpu_custom_call.1']
    #allocation4 [shape = 's32[1]{0}', space=sflag, size = 0x4, scoped, tag = 'scoped memory for tpu_custom_call.1']
    #allocation5 [shape = 'u8[131072]{0}', space=vmem, size = 0x20000, scoped, tag = 'output window, operand 0, single buffered']
    %6 = vsyncpa [#allocation3], 0
    %7 = vsyncpa [#allocation4], 0
    // Predicated region
    $region2: #{tpu_custom_call.1} parent=1 // pred_check
      _
    $region3: #{tpu_custom_call.1} parent=1 // pred_check_branch
      %9 = sbr.rel (0) target = $region5
    $region4: #{tpu_custom_call.1} parent=1 // pred_region
      %s11 = ssub.s32 4096, 4096
      %12 = vsyncadd [#allocation3], %s11
      %s13 = sshll.u32 [#allocation2], 4
      %s14 = int_to_ptr.vmem [resolvable:$true] %s13
      %19 = dma.hbm_to_vmem [thread:$0]  %s0, 4096, %s14, [#allocation3], 256, 256, 16
    $region5: #{tpu_custom_call.1} parent=1 // pred_fallthru
      _
    // Predicated region
    $region6: #{tpu_custom_call.1} parent=1 // pred_check
      _
    $region7: #{tpu_custom_call.1} parent=1 // pred_check_branch
      %21 = sbr.rel (0) target = $region9
    $region8: #{tpu_custom_call.1} parent=1 // pred_region
      %22 = dma.done [#allocation3], 4096
    $region9: #{tpu_custom_call.1} parent=1 // pred_fallthru
      _
    %v23 = vld [vmem:[#allocation2] sm:$0xff]
    %v24 = vld [vmem:[#allocation2 + $0x8] sm:$0xff]
    %v25 = vld [vmem:[#allocation2 + $0x10] sm:$0xff]
    %v26 = vld [vmem:[#allocation2 + $0x18] sm:$0xff]
    %v27 = vld [vmem:[#allocation2 + $0x20] sm:$0xff]
    %v28 = vld [vmem:[#allocation2 + $0x28] sm:$0xff]
    %v29 = vld [vmem:[#allocation2 + $0x30] sm:$0xff]
    %v30 = vld [vmem:[#allocation2 + $0x38] sm:$0xff]
    %v31 = vld [vmem:[#allocation2 + $0x40] sm:$0xff]
    %v32 = vld [vmem:[#allocation2 + $0x48] sm:$0xff]
    %v33 = vld [vmem:[#allocation2 + $0x50] sm:$0xff]
    %v34 = vld [vmem:[#allocation2 + $0x58] sm:$0xff]
    %v35 = vld [vmem:[#allocation2 + $0x60] sm:$0xff]
    %v36 = vld [vmem:[#allocation2 + $0x68] sm:$0xff]
    %v37 = vld [vmem:[#allocation2 + $0x70] sm:$0xff]
    %v38 = vld [vmem:[#allocation2 + $0x78] sm:$0xff]
    %v39 = vld [vmem:[#allocation2 + $0x80] sm:$0xff]
    %v40 = vld [vmem:[#allocation2 + $0x88] sm:$0xff]
    %v41 = vld [vmem:[#allocation2 + $0x90] sm:$0xff]
    %v42 = vld [vmem:[#allocation2 + $0x98] sm:$0xff]
    %v43 = vld [vmem:[#allocation2 + $0xa0] sm:$0xff]
    %v44 = vld [vmem:[#allocation2 + $0xa8] sm:$0xff]
    %v45 = vld [vmem:[#allocation2 + $0xb0] sm:$0xff]
    %v46 = vld [vmem:[#allocation2 + $0xb8] sm:$0xff]
    %v47 = vld [vmem:[#allocation2 + $0xc0] sm:$0xff]
    %v48 = vld [vmem:[#allocation2 + $0xc8] sm:$0xff]
    %v49 = vld [vmem:[#allocation2 + $0xd0] sm:$0xff]
    %v50 = vld [vmem:[#allocation2 + $0xd8] sm:$0xff]
    %v51 = vld [vmem:[#allocation2 + $0xe0] sm:$0xff]
    %v52 = vld [vmem:[#allocation2 + $0xe8] sm:$0xff]
    %v53 = vld [vmem:[#allocation2 + $0xf0] sm:$0xff]
    %v54 = vld [vmem:[#allocation2 + $0xf8] sm:$0xff]
    %v55 = vmul.f32 %v23, %v23
    %v56 = vmul.f32 %v24, %v24
    %v57 = vmul.f32 %v25, %v25
    %v58 = vmul.f32 %v26, %v26
    %v59 = vmul.f32 %v27, %v27
    %v60 = vmul.f32 %v28, %v28
    %v61 = vmul.f32 %v29, %v29
    %v62 = vmul.f32 %v30, %v30
    %v63 = vmul.f32 %v31, %v31
    %v64 = vmul.f32 %v32, %v32
    %v65 = vmul.f32 %v33, %v33
    %v66 = vmul.f32 %v34, %v34
    %v67 = vmul.f32 %v35, %v35
    %v68 = vmul.f32 %v36, %v36
    %v69 = vmul.f32 %v37, %v37
    %v70 = vmul.f32 %v38, %v38
    %v71 = vmul.f32 %v39, %v39
    %v72 = vmul.f32 %v40, %v40
    %v73 = vmul.f32 %v41, %v41
    %v74 = vmul.f32 %v42, %v42
    %v75 = vmul.f32 %v43, %v43
    %v76 = vmul.f32 %v44, %v44
    %v77 = vmul.f32 %v45, %v45
    %v78 = vmul.f32 %v46, %v46
    %v79 = vmul.f32 %v47, %v47
    %v80 = vmul.f32 %v48, %v48
    %v81 = vmul.f32 %v49, %v49
    %v82 = vmul.f32 %v50, %v50
    %v83 = vmul.f32 %v51, %v51
    %v84 = vmul.f32 %v52, %v52
    %v85 = vmul.f32 %v53, %v53
    %v86 = vmul.f32 %v54, %v54
    %v87 = vmul.f32 %v55, %v23
    %v88 = vmul.f32 %v56, %v24
    %v89 = vmul.f32 %v57, %v25
    %v90 = vmul.f32 %v58, %v26
    %v91 = vmul.f32 %v59, %v27
    %v92 = vmul.f32 %v60, %v28
    %v93 = vmul.f32 %v61, %v29
    %v94 = vmul.f32 %v62, %v30
    %v95 = vmul.f32 %v63, %v31
    %v96 = vmul.f32 %v64, %v32
    %v97 = vmul.f32 %v65, %v33
    %v98 = vmul.f32 %v66, %v34
    %v99 = vmul.f32 %v67, %v35
    %v100 = vmul.f32 %v68, %v36
    %v101 = vmul.f32 %v69, %v37
    %v102 = vmul.f32 %v70, %v38
    %v103 = vmul.f32 %v71, %v39
    %v104 = vmul.f32 %v72, %v40
    %v105 = vmul.f32 %v73, %v41
    %v106 = vmul.f32 %v74, %v42
    %v107 = vmul.f32 %v75, %v43
    %v108 = vmul.f32 %v76, %v44
    %v109 = vmul.f32 %v77, %v45
    %v110 = vmul.f32 %v78, %v46
    %v111 = vmul.f32 %v79, %v47
    %v112 = vmul.f32 %v80, %v48
    %v113 = vmul.f32 %v81, %v49
    %v114 = vmul.f32 %v82, %v50
    %v115 = vmul.f32 %v83, %v51
    %v116 = vmul.f32 %v84, %v52
    %v117 = vmul.f32 %v85, %v53
    %v118 = vmul.f32 %v86, %v54
    %v119 = vmul.f32 %v87, 0.044715
    %v120 = vmul.f32 %v88, 0.044715
    %v121 = vmul.f32 %v89, 0.044715
    %v122 = vmul.f32 %v90, 0.044715
    %v123 = vmul.f32 %v91, 0.044715
    %v124 = vmul.f32 %v92, 0.044715
    %v125 = vmul.f32 %v93, 0.044715
    %v126 = vmul.f32 %v94, 0.044715
    %v127 = vmul.f32 %v95, 0.044715
    %v128 = vmul.f32 %v96, 0.044715
    %v129 = vmul.f32 %v97, 0.044715
    %v130 = vmul.f32 %v98, 0.044715
    %v131 = vmul.f32 %v99, 0.044715
    %v132 = vmul.f32 %v100, 0.044715
    %v133 = vmul.f32 %v101, 0.044715
    %v134 = vmul.f32 %v102, 0.044715
    %v135 = vmul.f32 %v103, 0.044715
    %v136 = vmul.f32 %v104, 0.044715
    %v137 = vmul.f32 %v105, 0.044715
    %v138 = vmul.f32 %v106, 0.044715
    %v139 = vmul.f32 %v107, 0.044715
    %v140 = vmul.f32 %v108, 0.044715
    %v141 = vmul.f32 %v109, 0.044715
    %v142 = vmul.f32 %v110, 0.044715
    %v143 = vmul.f32 %v111, 0.044715
    %v144 = vmul.f32 %v112, 0.044715
    %v145 = vmul.f32 %v113, 0.044715
    %v146 = vmul.f32 %v114, 0.044715
    %v147 = vmul.f32 %v115, 0.044715
    %v148 = vmul.f32 %v116, 0.044715
    %v149 = vmul.f32 %v117, 0.044715
    %v150 = vmul.f32 %v118, 0.044715
    %v151 = vadd.f32 %v23, %v119
    %v152 = vadd.f32 %v24, %v120
    %v153 = vadd.f32 %v25, %v121
    %v154 = vadd.f32 %v26, %v122
    %v155 = vadd.f32 %v27, %v123
    %v156 = vadd.f32 %v28, %v124
    %v157 = vadd.f32 %v29, %v125
    %v158 = vadd.f32 %v30, %v126
    %v159 = vadd.f32 %v31, %v127
    %v160 = vadd.f32 %v32, %v128
    %v161 = vadd.f32 %v33, %v129
    %v162 = vadd.f32 %v34, %v130
    %v163 = vadd.f32 %v35, %v131
    %v164 = vadd.f32 %v36, %v132
    %v165 = vadd.f32 %v37, %v133
    %v166 = vadd.f32 %v38, %v134
    %v167 = vadd.f32 %v39, %v135
    %v168 = vadd.f32 %v40, %v136
    %v169 = vadd.f32 %v41, %v137
    %v170 = vadd.f32 %v42, %v138
    %v171 = vadd.f32 %v43, %v139
    %v172 = vadd.f32 %v44, %v140
    %v173 = vadd.f32 %v45, %v141
    %v174 = vadd.f32 %v46, %v142
    %v175 = vadd.f32 %v47, %v143
    %v176 = vadd.f32 %v48, %v144
    %v177 = vadd.f32 %v49, %v145
    %v178 = vadd.f32 %v50, %v146
    %v179 = vadd.f32 %v51, %v147
    %v180 = vadd.f32 %v52, %v148
    %v181 = vadd.f32 %v53, %v149
    %v182 = vadd.f32 %v54, %v150
    %v183 = vmul.f32 %v151, 0.7978846
    %v184 = vmul.f32 %v152, 0.7978846
    %v185 = vmul.f32 %v153, 0.7978846
    %v186 = vmul.f32 %v154, 0.7978846
    %v187 = vmul.f32 %v155, 0.7978846
    %v188 = vmul.f32 %v156, 0.7978846
    %v189 = vmul.f32 %v157, 0.7978846
    %v190 = vmul.f32 %v158, 0.7978846
    %v191 = vmul.f32 %v159, 0.7978846
    %v192 = vmul.f32 %v160, 0.7978846
    %v193 = vmul.f32 %v161, 0.7978846
    %v194 = vmul.f32 %v162, 0.7978846
    %v195 = vmul.f32 %v163, 0.7978846
    %v196 = vmul.f32 %v164, 0.7978846
    %v197 = vmul.f32 %v165, 0.7978846
    %v198 = vmul.f32 %v166, 0.7978846
    %v199 = vmul.f32 %v167, 0.7978846
    %v200 = vmul.f32 %v168, 0.7978846
    %v201 = vmul.f32 %v169, 0.7978846
    %v202 = vmul.f32 %v170, 0.7978846
    %v203 = vmul.f32 %v171, 0.7978846
    %v204 = vmul.f32 %v172, 0.7978846
    %v205 = vmul.f32 %v173, 0.7978846
    %v206 = vmul.f32 %v174, 0.7978846
    %v207 = vmul.f32 %v175, 0.7978846
    %v208 = vmul.f32 %v176, 0.7978846
    %v209 = vmul.f32 %v177, 0.7978846
    %v210 = vmul.f32 %v178, 0.7978846
    %v211 = vmul.f32 %v179, 0.7978846
    %v212 = vmul.f32 %v180, 0.7978846
    %v213 = vmul.f32 %v181, 0.7978846
    %v214 = vmul.f32 %v182, 0.7978846
    %v215 = vmul.f32 %v23, 0.5
    %v216 = vmul.f32 %v24, 0.5
    %v217 = vmul.f32 %v25, 0.5
    %v218 = vmul.f32 %v26, 0.5
    %v219 = vmul.f32 %v27, 0.5
    %v220 = vmul.f32 %v28, 0.5
    %v221 = vmul.f32 %v29, 0.5
    %v222 = vmul.f32 %v30, 0.5
    %v223 = vmul.f32 %v31, 0.5
    %v224 = vmul.f32 %v32, 0.5
    %v225 = vmul.f32 %v33, 0.5
    %v226 = vmul.f32 %v34, 0.5
    %v227 = vmul.f32 %v35, 0.5
    %v228 = vmul.f32 %v36, 0.5
    %v229 = vmul.f32 %v37, 0.5
    %v230 = vmul.f32 %v38, 0.5
    %v231 = vmul.f32 %v39, 0.5
    %v232 = vmul.f32 %v40, 0.5
    %v233 = vmul.f32 %v41, 0.5
    %v234 = vmul.f32 %v42, 0.5
    %v235 = vmul.f32 %v43, 0.5
    %v236 = vmul.f32 %v44, 0.5
    %v237 = vmul.f32 %v45, 0.5
    %v238 = vmul.f32 %v46, 0.5
    %v239 = vmul.f32 %v47, 0.5
    %v240 = vmul.f32 %v48, 0.5
    %v241 = vmul.f32 %v49, 0.5
    %v242 = vmul.f32 %v50, 0.5
    %v243 = vmul.f32 %v51, 0.5
    %v244 = vmul.f32 %v52, 0.5
    %v245 = vmul.f32 %v53, 0.5
    %v246 = vmul.f32 %v54, 0.5
    %v247 = vtanh.pop %v183
    %v248 = vtanh.pop %v184
    %v249 = vtanh.pop %v185
    %v250 = vtanh.pop %v186
    %v251 = vtanh.pop %v187
    %v252 = vtanh.pop %v188
    %v253 = vtanh.pop %v189
    %v254 = vtanh.pop %v190
    %v255 = vtanh.pop %v191
    %v256 = vtanh.pop %v192
    %v257 = vtanh.pop %v193
    %v258 = vtanh.pop %v194
    %v259 = vtanh.pop %v195
    %v260 = vtanh.pop %v196
    %v261 = vtanh.pop %v197
    %v262 = vtanh.pop %v198
    %v263 = vtanh.pop %v199
    %v264 = vtanh.pop %v200
    %v265 = vtanh.pop %v201
    %v266 = vtanh.pop %v202
    %v267 = vtanh.pop %v203
    %v268 = vtanh.pop %v204
    %v269 = vtanh.pop %v205
    %v270 = vtanh.pop %v206
    %v271 = vtanh.pop %v207
    %v272 = vtanh.pop %v208
    %v273 = vtanh.pop %v209
    %v274 = vtanh.pop %v210
    %v275 = vtanh.pop %v211
    %v276 = vtanh.pop %v212
    %v277 = vtanh.pop %v213
    %v278 = vtanh.pop %v214
    %v279 = vadd.f32 %v247, 1.0
    %v280 = vadd.f32 %v248, 1.0
    %v281 = vadd.f32 %v249, 1.0
    %v282 = vadd.f32 %v250, 1.0
    %v283 = vadd.f32 %v251, 1.0
    %v284 = vadd.f32 %v252, 1.0
    %v285 = vadd.f32 %v253, 1.0
    %v286 = vadd.f32 %v254, 1.0
    %v287 = vadd.f32 %v255, 1.0
    %v288 = vadd.f32 %v256, 1.0
    %v289 = vadd.f32 %v257, 1.0
    %v290 = vadd.f32 %v258, 1.0
    %v291 = vadd.f32 %v259, 1.0
    %v292 = vadd.f32 %v260, 1.0
    %v293 = vadd.f32 %v261, 1.0
    %v294 = vadd.f32 %v262, 1.0
    %v295 = vadd.f32 %v263, 1.0
    %v296 = vadd.f32 %v264, 1.0
    %v297 = vadd.f32 %v265, 1.0
    %v298 = vadd.f32 %v266, 1.0
    %v299 = vadd.f32 %v267, 1.0
    %v300 = vadd.f32 %v268, 1.0
    %v301 = vadd.f32 %v269, 1.0
    %v302 = vadd.f32 %v270, 1.0
    %v303 = vadd.f32 %v271, 1.0
    %v304 = vadd.f32 %v272, 1.0
    %v305 = vadd.f32 %v273, 1.0
    %v306 = vadd.f32 %v274, 1.0
    %v307 = vadd.f32 %v275, 1.0
    %v308 = vadd.f32 %v276, 1.0
    %v309 = vadd.f32 %v277, 1.0
    %v310 = vadd.f32 %v278, 1.0
    %v311 = vmul.f32 %v215, %v279
    %v312 = vmul.f32 %v216, %v280
    %v313 = vmul.f32 %v217, %v281
    %v314 = vmul.f32 %v218, %v282
    %v315 = vmul.f32 %v219, %v283
    %v316 = vmul.f32 %v220, %v284
    %v317 = vmul.f32 %v221, %v285
    %v318 = vmul.f32 %v222, %v286
    %v319 = vmul.f32 %v223, %v287
    %v320 = vmul.f32 %v224, %v288
    %v321 = vmul.f32 %v225, %v289
    %v322 = vmul.f32 %v226, %v290
    %v323 = vmul.f32 %v227, %v291
    %v324 = vmul.f32 %v228, %v292
    %v325 = vmul.f32 %v229, %v293
    %v326 = vmul.f32 %v230, %v294
    %v327 = vmul.f32 %v231, %v295
    %v328 = vmul.f32 %v232, %v296
    %v329 = vmul.f32 %v233, %v297
    %v330 = vmul.f32 %v234, %v298
    %v331 = vmul.f32 %v235, %v299
    %v332 = vmul.f32 %v236, %v300
    %v333 = vmul.f32 %v237, %v301
    %v334 = vmul.f32 %v238, %v302
    %v335 = vmul.f32 %v239, %v303
    %v336 = vmul.f32 %v240, %v304
    %v337 = vmul.f32 %v241, %v305
    %v338 = vmul.f32 %v242, %v306
    %v339 = vmul.f32 %v243, %v307
    %v340 = vmul.f32 %v244, %v308
    %v341 = vmul.f32 %v245, %v309
    %v342 = vmul.f32 %v246, %v310
    %343 = vst [vmem:[#allocation5] sm:$0xff] %v311
    %344 = vst [vmem:[#allocation5 + $0x8] sm:$0xff] %v312
    %345 = vst [vmem:[#allocation5 + $0x10] sm:$0xff] %v313
    %346 = vst [vmem:[#allocation5 + $0x18] sm:$0xff] %v314
    %347 = vst [vmem:[#allocation5 + $0x20] sm:$0xff] %v315
    %348 = vst [vmem:[#allocation5 + $0x28] sm:$0xff] %v316
    %349 = vst [vmem:[#allocation5 + $0x30] sm:$0xff] %v317
    %350 = vst [vmem:[#allocation5 + $0x38] sm:$0xff] %v318
    %351 = vst [vmem:[#allocation5 + $0x40] sm:$0xff] %v319
    %352 = vst [vmem:[#allocation5 + $0x48] sm:$0xff] %v320
    %353 = vst [vmem:[#allocation5 + $0x50] sm:$0xff] %v321
    %354 = vst [vmem:[#allocation5 + $0x58] sm:$0xff] %v322
    %355 = vst [vmem:[#allocation5 + $0x60] sm:$0xff] %v323
    %356 = vst [vmem:[#allocation5 + $0x68] sm:$0xff] %v324
    %357 = vst [vmem:[#allocation5 + $0x70] sm:$0xff] %v325
    %358 = vst [vmem:[#allocation5 + $0x78] sm:$0xff] %v326
    %359 = vst [vmem:[#allocation5 + $0x80] sm:$0xff] %v327
    %360 = vst [vmem:[#allocation5 + $0x88] sm:$0xff] %v328
    %361 = vst [vmem:[#allocation5 + $0x90] sm:$0xff] %v329
    %362 = vst [vmem:[#allocation5 + $0x98] sm:$0xff] %v330
    %363 = vst [vmem:[#allocation5 + $0xa0] sm:$0xff] %v331
    %364 = vst [vmem:[#allocation5 + $0xa8] sm:$0xff] %v332
    %365 = vst [vmem:[#allocation5 + $0xb0] sm:$0xff] %v333
    %366 = vst [vmem:[#allocation5 + $0xb8] sm:$0xff] %v334
    %367 = vst [vmem:[#allocation5 + $0xc0] sm:$0xff] %v335
    %368 = vst [vmem:[#allocation5 + $0xc8] sm:$0xff] %v336
    %369 = vst [vmem:[#allocation5 + $0xd0] sm:$0xff] %v337
    %370 = vst [vmem:[#allocation5 + $0xd8] sm:$0xff] %v338
    %371 = vst [vmem:[#allocation5 + $0xe0] sm:$0xff] %v339
    %372 = vst [vmem:[#allocation5 + $0xe8] sm:$0xff] %v340
    %373 = vst [vmem:[#allocation5 + $0xf0] sm:$0xff] %v341
    %374 = vst [vmem:[#allocation5 + $0xf8] sm:$0xff] %v342
    // Predicated region
    $region10: #{tpu_custom_call.1} parent=1 // pred_check
      _
    $region11: #{tpu_custom_call.1} parent=1 // pred_check_branch
      %376 = sbr.rel (0) target = $region13
    $region12: #{tpu_custom_call.1} parent=1 // pred_region
      %s378 = ssub.s32 4096, 4096
      %379 = vsyncadd [#allocation4], %s378
      %s380 = sshll.u32 [#allocation5], 4
      %s381 = int_to_ptr.vmem [resolvable:$true] %s380
      %386 = dma.vmem_to_hbm [thread:$0]  %s381, 4096, %s1, [#allocation4], 256, 256, 16
    $region13: #{tpu_custom_call.1} parent=1 // pred_fallthru
      _
    // Predicated region
    $region14: #{tpu_custom_call.1} parent=1 // pred_check
      _
    $region15: #{tpu_custom_call.1} parent=1 // pred_check_branch
      %388 = sbr.rel (0) target = $region17
    $region16: #{tpu_custom_call.1} parent=1 // pred_region
      %389 = dma.done [#allocation4], 4096
    $region17: #{tpu_custom_call.1} parent=1 // pred_fallthru
      _
    %390 = vsyncpa [#allocation3], 1
    %391 = vsyncpa [#allocation4], 1

</llo_original>
